<compile_context>
chip_gen: v5e
topology: v5e:2x2
jax: 0.10.0
libtpu: 0.0.40
codegen_flags: <defaults>
</compile_context>

<pallas_src>
import numpy as np
import jax
import jax.numpy as jnp
from jax.experimental import pallas as pl
from jax.experimental.pallas import tpu as pltpu


# ---------------------------------------------------------------------------
# Trace-time helpers (pure numpy: shift bookkeeping & weight packing)
# ---------------------------------------------------------------------------
def tap_segments(T, Tpad, shift):
    """Exact emulation of F.pad(conv(x), (0, Tpad-T)) + torch.roll(shift) + crop.

    Returns a tuple of (out_start, length, src_start): output cols
    [out_start, out_start+length) receive conv cols [src_start, src_start+length);
    all other output cols get zero (pad region -> no feature AND no bias).
    """
    src = (np.arange(T) - shift) % Tpad
    valid = src < T
    segs = []
    i = 0
    while i < T:
        if not valid[i]:
            i += 1
            continue
        j = i
        while j + 1 < T and valid[j + 1] and src[j + 1] == src[j] + 1:
            j += 1
        segs.append((int(i), int(j - i + 1), int(src[i])))
        i = j + 1
    return tuple(segs)


def pack_layer(T, C, K, dilation, lat, p, slot):
    """Pack one latent_CausalConv1d layer for the fused kernel.

    Returns
      w_all : (E*slot, C)   bf16  stacked per-pattern tap weights
                             rows [e*slot, e*slot+C)  = conv1 taps (summed)
                             rows [e*slot+C, e*slot+2C)= conv2 taps (summed)
      b_all : (E*slot, 1)   f32   matching biases (masked together with z)
      w_comb: (C, slot+C)   bf16  [mixing conv | residual conv] fused weight
      b_comb: (C, 1)        f32   bm + br
      segs  : list (length E) of segment tuples for the kernel closure.
    """
    entries_w, entries_b, order = {}, {}, []

    def add_conv(W, b, dil, row_off):
        Tpad = T + dil * (K - 1)
        shifts = [-lat] + [j * dil for j in range(K)]
        for i, s in enumerate(shifts):
            segs = tap_segments(T, Tpad, s)
            if not segs:          # tap entirely in the pad region -> drop
                continue
            if segs not in entries_w:
                entries_w[segs] = np.zeros((slot, C), np.float32)
                entries_b[segs] = np.zeros((slot,), np.float32)
                order.append(segs)
            entries_w[segs][row_off:row_off + C, :] += np.asarray(W[i], np.float32)
            entries_b[segs][row_off:row_off + C] += np.asarray(b[i], np.float32)

    add_conv(p['w1'], p['b1'], dilation, 0)
    add_conv(p['w2'], p['b2'], 2 * dilation, C)

    w_all = np.concatenate([entries_w[k] for k in order], axis=0)           # (E*slot, C)
    b_all = np.concatenate([entries_b[k] for k in order], axis=0)[:, None]  # (E*slot, 1)

    w_comb = np.zeros((C, slot + C), np.float32)
    w_comb[:, :2 * C] = np.asarray(p['wm'], np.float32)        # mixing conv
    w_comb[:, slot:slot + C] = np.asarray(p['wr'], np.float32) # residual conv
    b_comb = (np.asarray(p['bm'], np.float32) + np.asarray(p['br'], np.float32))[:, None]

    return (jnp.asarray(w_all, jnp.bfloat16),
            jnp.asarray(b_all, jnp.float32),
            jnp.asarray(w_comb, jnp.bfloat16),
            jnp.asarray(b_comb, jnp.float32),
            list(order))


# ---------------------------------------------------------------------------
# Fused Pallas kernel: all TCN layers for one batch element per grid step.
# Activation lives in vregs/VMEM values across layers (no HBM round trips).
# ---------------------------------------------------------------------------
def make_tcn_kernel(T, C, slot, seglists):
    L = len(seglists)
    f32 = jnp.float32
    bf16 = jnp.bfloat16

    def lane_roll(v, d):
        """Circular roll along the lane (time) axis: out[:, t] = v[:, (t-d) % T]."""
        d = d % T
        if d == 0:
            return v
        return jnp.concatenate([v[:, T - d:], v[:, :T - d]], axis=1)

    def kernel(*refs):
        x_ref = refs[0]
        o_ref = refs[1 + 4 * L]
        col = jax.lax.broadcasted_iota(jnp.int32, (slot, T), 1)

        act = x_ref[0].astype(f32)                       # (C, T), time on lanes
        for l in range(L):
            w_all = refs[1 + 4 * l][...]                 # (E*slot, C) bf16
            b_all = refs[2 + 4 * l][...]                 # (E*slot, 1) f32
            w_comb = refs[3 + 4 * l][...]                # (C, slot + C) bf16
            b_comb = refs[4 + 4 * l][...]                # (C, 1) f32

            # All defConv2 taps of both convs in ONE matmul (bias added in f32;
            # it is masked together with the features below, matching F.pad).
            z = jnp.dot(w_all, act.astype(bf16),
                        preferred_element_type=f32) + b_all      # (E*slot, T)

            # pad + roll resolved at trace time: per pattern a lane roll plus a
            # column mask, accumulated in registers (no scratch stores).
            y = None
            for e, segs in enumerate(seglists[l]):
                ze = z[e * slot:(e + 1) * slot, :]
                for (o, ln, ss) in segs:
                    v = lane_roll(ze, o - ss)
                    if not (o == 0 and ln == T):
                        v = jnp.where((col >= o) & (col < o + ln), v, 0.0)
                    y = v if y is None else y + v

            # ELU (dropout is identity at inference).
            y = jnp.where(y > 0.0, y, jnp.exp(jnp.minimum(y, 0.0)) - 1.0)

            # Fused mixing conv + residual conv: one matmul on [ELU(y) ; act].
            operand = jnp.concatenate([y, act], axis=0).astype(bf16)  # (slot+C, T)
            act = jnp.dot(w_comb, operand,
                          preferred_element_type=f32) + b_comb        # (C, T)

        o_ref[0] = act
    return kernel


def fused_tcn_pallas(x, layer_data, seglists, B, T, C, slot):
    L = len(layer_data)

    in_specs = [pl.BlockSpec((1, C, T), lambda b: (b, 0, 0))]
    inputs = [x]
    for (w_all, b_all, w_comb, b_comb) in layer_data:
        in_specs.append(pl.BlockSpec(w_all.shape, lambda b: (0, 0)))
        in_specs.append(pl.BlockSpec(b_all.shape, lambda b: (0, 0)))
        in_specs.append(pl.BlockSpec(w_comb.shape, lambda b: (0, 0)))
        in_specs.append(pl.BlockSpec(b_comb.shape, lambda b: (0, 0)))
        inputs += [w_all, b_all, w_comb, b_comb]

    return pl.pallas_call(
        make_tcn_kernel(T, C, slot, seglists),
        out_shape=jax.ShapeDtypeStruct((B, C, T), jnp.float32),
        grid_spec=pltpu.PrefetchScalarGridSpec(
            num_scalar_prefetch=0,
            grid=(B,),                        # batch elements are independent
            in_specs=in_specs,
            out_specs=pl.BlockSpec((1, C, T), lambda b: (b, 0, 0)),
        ),
        compiler_params=pltpu.CompilerParams(
            dimension_semantics=("parallel",)),   # shard batch across TCs (v7x)
    )(*inputs)


def tcn_forward(x_bct, params, kernel_size, latency=0):
    """x_bct: (B, C, T) like the PyTorch module; returns (B, C, T)."""
    B, C, T = x_bct.shape
    L = len(params)
    slot = max(8, ((2 * C + 7) // 8) * 8)   # sublane-aligned per-pattern slot

    # Trace-time parameter packing (per-layer latency split mirrors the ctor).
    layer_data, seglists = [], []
    unused = latency
    for i, p in enumerate(params):
        lat = int(round(unused / (L - i)))
        unused -= lat
        w_all, b_all, w_comb, b_comb, segs = pack_layer(
            T, C, kernel_size, 2 ** i, lat, p, slot)
        layer_data.append((w_all, b_all, w_comb, b_comb))
        seglists.append(segs)

    x = x_bct.astype(jnp.float32)
    return fused_tcn_pallas(x, layer_data, seglists, B, T, C, slot)


# ---------------------------------------------------------------------------
# Parameters
# ---------------------------------------------------------------------------
def build_params(key, inputs, channels, kernel_size):
    n_taps = kernel_size + 1
    params = []
    cin = inputs
    for i, cout in enumerate(channels):
        ks = jax.random.split(jax.random.fold_in(key, i), 8)
        params.append(dict(
            w1=0.1 * jax.random.normal(ks[0], (n_taps, cout, cin), jnp.float32),
            b1=0.1 * jax.random.normal(ks[1], (n_taps, cout), jnp.float32),
            w2=0.1 * jax.random.normal(ks[2], (n_taps, cout, cin), jnp.float32),
            b2=0.1 * jax.random.normal(ks[3], (n_taps, cout), jnp.float32),
            wm=0.1 * jax.random.normal(ks[4], (cout, 2 * cout), jnp.float32),
            bm=0.1 * jax.random.normal(ks[5], (cout,), jnp.float32),
            wr=0.1 * jax.random.normal(ks[6], (cout, cin), jnp.float32),
            br=0.1 * jax.random.normal(ks[7], (cout,), jnp.float32),
        ))
        cin = cout
    return params


# ---------------------------------------------------------------------------
# Pure-JAX reference (mirrors the PyTorch code: pad + roll + sum)
# ---------------------------------------------------------------------------
def ref_defconv2(x_bct, W, b, dilation, latency, K):
    B, C, T = x_bct.shape
    P = dilation * (K - 1)
    shifts = [-latency] + [j * dilation for j in range(K)]
    acc = jnp.zeros((B, W.shape[1], T + P), jnp.float32)
    for i, s in enumerate(shifts):
        conv = jnp.einsum('oc,bct->bot', W[i], x_bct) + b[i][None, :, None]
        feat = jnp.pad(conv, ((0, 0), (0, 0), (0, P)))
        acc = acc + jnp.roll(feat, s, axis=-1)
    return acc[:, :, :T]


def tcn_reference(x_bct, params, kernel_size, latency=0):
    x = x_bct.astype(jnp.float32)
    n_levels = len(params)
    unused = latency
    for i, p in enumerate(params):
        lat = int(round(unused / (n_levels - i)))
        unused -= lat
        d = 2 ** i
        y1 = ref_defconv2(x, p['w1'], p['b1'], d, lat, kernel_size)
        y2 = ref_defconv2(x, p['w2'], p['b2'], 2 * d, lat, kernel_size)
        y = jnp.concatenate([y1, y2], axis=1)
        y = jax.nn.elu(y)
        y = jnp.einsum('oc,bct->bot', p['wm'], y) + p['bm'][None, :, None]
        y = y + jnp.einsum('oc,bct->bot', p['wr'], x) + p['br'][None, :, None]
        x = y
    return x


if __name__ == "__main__":
    B, Cin, T = 2, 4, 16
    channels = [4, 4]        # must equal Cin: defConv2 only broadcasts when in==out
    kernel_size = 5
    assert all(c == Cin for c in channels)
    # TODO(synk): MainModule's nnAudio STFT / AmplitudeToDB / 2-D conv+pool
    # front-end and the beat/dbeat sigmoid heads are outside the listed TCN
    # classes and are not implemented here.
    # TODO(synk): the `downsample` 1x1 conv of latent_CausalConv1d is omitted —
    # it is only constructed when in_channels != out_channels, a configuration
    # in which the original PyTorch forward cannot run.

    key = jax.random.PRNGKey(0)
    kx, kp = jax.random.split(key)
    x = jax.random.normal(kx, (B, Cin, T), jnp.float32)   # NCT like PyTorch
    params = build_params(kp, Cin, channels, kernel_size)

    # latency 0  = purely causal
    # latency 3  = small look-ahead tap
    # latency 20 = look-ahead beyond the pad width (exercises the wrap segments)
    for latency in (0, 3, 20):
        out = jax.block_until_ready(tcn_forward(x, params, kernel_size, latency))
        ref = tcn_reference(x, params, kernel_size, latency)
        np.testing.assert_allclose(np.asarray(out), np.asarray(ref),
                                   rtol=5e-2, atol=5e-2)
    print("KERNEL_OK")
</pallas_src>

<mosaic_0001>
module attributes {stable_mosaic.version = 11 : i64} {
  func.func @kernel(%arg0: i32, %arg1: memref<1x4x16xf32, #tpu.memory_space<vmem>>, %arg2: memref<56x4xbf16, #tpu.memory_space<vmem>>, %arg3: memref<56x1xf32, #tpu.memory_space<vmem>>, %arg4: memref<4x12xbf16, #tpu.memory_space<vmem>>, %arg5: memref<4x1xf32, #tpu.memory_space<vmem>>, %arg6: memref<48x4xbf16, #tpu.memory_space<vmem>>, %arg7: memref<48x1xf32, #tpu.memory_space<vmem>>, %arg8: memref<4x12xbf16, #tpu.memory_space<vmem>>, %arg9: memref<4x1xf32, #tpu.memory_space<vmem>>, %arg10: memref<1x4x16xf32, #tpu.memory_space<vmem>>) attributes {dimension_semantics = [#tpu.dimension_semantics<parallel>], iteration_bounds = array<i64: 2>, scalar_prefetch = 0 : i64, scratch_operands = 0 : i64, tpu.core_type = #tpu.core_type<tc>, window_params = [{transform_indices = @transform_0, window_bounds = array<i64: 1, 4, 16>}, {pipeline_mode = #tpu.pipeline_mode<synchronous>, transform_indices = @transform_1, window_bounds = array<i64: 56, 4>}, {pipeline_mode = #tpu.pipeline_mode<synchronous>, transform_indices = @transform_2, window_bounds = array<i64: 56, 1>}, {pipeline_mode = #tpu.pipeline_mode<synchronous>, transform_indices = @transform_3, window_bounds = array<i64: 4, 12>}, {pipeline_mode = #tpu.pipeline_mode<synchronous>, transform_indices = @transform_4, window_bounds = array<i64: 4, 1>}, {pipeline_mode = #tpu.pipeline_mode<synchronous>, transform_indices = @transform_5, window_bounds = array<i64: 48, 4>}, {pipeline_mode = #tpu.pipeline_mode<synchronous>, transform_indices = @transform_6, window_bounds = array<i64: 48, 1>}, {pipeline_mode = #tpu.pipeline_mode<synchronous>, transform_indices = @transform_7, window_bounds = array<i64: 4, 12>}, {pipeline_mode = #tpu.pipeline_mode<synchronous>, transform_indices = @transform_8, window_bounds = array<i64: 4, 1>}, {transform_indices = @transform_9, window_bounds = array<i64: 1, 4, 16>}]} {
    %0 = tpu.iota {dimensions = array<i32: 1>} : vector<8x16xi32>
    %c0 = arith.constant 0 : index
    %c0_0 = arith.constant 0 : index
    %c0_1 = arith.constant 0 : index
    %1 = vector.load %arg1[%c0, %c0_0, %c0_1] : memref<1x4x16xf32, #tpu.memory_space<vmem>>, vector<1x4x16xf32>
    %2 = vector.shape_cast %1 : vector<1x4x16xf32> to vector<4x16xf32>
    %c0_2 = arith.constant 0 : index
    %c0_3 = arith.constant 0 : index
    %3 = vector.load %arg2[%c0_2, %c0_3] : memref<56x4xbf16, #tpu.memory_space<vmem>>, vector<56x4xbf16>
    %c0_4 = arith.constant 0 : index
    %c0_5 = arith.constant 0 : index
    %4 = vector.load %arg3[%c0_4, %c0_5] : memref<56x1xf32, #tpu.memory_space<vmem>>, vector<56x1xf32>
    %c0_6 = arith.constant 0 : index
    %c0_7 = arith.constant 0 : index
    %5 = vector.load %arg4[%c0_6, %c0_7] : memref<4x12xbf16, #tpu.memory_space<vmem>>, vector<4x12xbf16>
    %c0_8 = arith.constant 0 : index
    %c0_9 = arith.constant 0 : index
    %6 = vector.load %arg5[%c0_8, %c0_9] : memref<4x1xf32, #tpu.memory_space<vmem>>, vector<4x1xf32>
    %7 = arith.truncf %2 : vector<4x16xf32> to vector<4x16xbf16>
    %cst = arith.constant dense<0.000000e+00> : vector<56x16xf32>
    %8 = tpu.matmul %3, %7, %cst {dimension_numbers = #tpu.dot_dimension_numbers<[1], [0], [0], [1], [0, 0, 1, 1], [], []>} : vector<56x4xbf16>, vector<4x16xbf16>, vector<56x16xf32> -> vector<56x16xf32>
    %9 = vector.broadcast %4 : vector<56x1xf32> to vector<56x16xf32>
    %10 = arith.addf %8, %9 : vector<56x16xf32>
    %11 = vector.extract_strided_slice %10 {offsets = [0, 0], sizes = [8, 16], strides = [1, 1]} : vector<56x16xf32> to vector<8x16xf32>
    %12 = vector.extract_strided_slice %10 {offsets = [8, 0], sizes = [8, 16], strides = [1, 1]} : vector<56x16xf32> to vector<8x16xf32>
    %13 = vector.extract_strided_slice %12 {offsets = [0, 15], sizes = [8, 1], strides = [1, 1]} : vector<8x16xf32> to vector<8x1xf32>
    %14 = vector.extract_strided_slice %12 {offsets = [0, 0], sizes = [8, 15], strides = [1, 1]} : vector<8x16xf32> to vector<8x15xf32>
    %15 = tpu.concatenate %13, %14 in 1 : vector<8x1xf32>, vector<8x15xf32> -> vector<8x16xf32>
    %c1_i32 = arith.constant 1 : i32
    %16 = vector.broadcast %c1_i32 : i32 to vector<8x16xi32>
    %17 = arith.cmpi sge, %0, %16 : vector<8x16xi32>
    %c16_i32 = arith.constant 16 : i32
    %18 = vector.broadcast %c16_i32 : i32 to vector<8x16xi32>
    %19 = arith.cmpi slt, %0, %18 : vector<8x16xi32>
    %20 = arith.andi %17, %19 : vector<8x16xi1>
    %cst_10 = arith.constant 0.000000e+00 : f32
    %21 = vector.broadcast %cst_10 : f32 to vector<8x16xf32>
    %22 = arith.select %20, %15, %21 : vector<8x16xi1>, vector<8x16xf32>
    %23 = arith.addf %11, %22 : vector<8x16xf32>
    %24 = vector.extract_strided_slice %10 {offsets = [16, 0], sizes = [8, 16], strides = [1, 1]} : vector<56x16xf32> to vector<8x16xf32>
    %25 = vector.extract_strided_slice %24 {offsets = [0, 14], sizes = [8, 2], strides = [1, 1]} : vector<8x16xf32> to vector<8x2xf32>
    %26 = vector.extract_strided_slice %24 {offsets = [0, 0], sizes = [8, 14], strides = [1, 1]} : vector<8x16xf32> to vector<8x14xf32>
    %27 = tpu.concatenate %25, %26 in 1 : vector<8x2xf32>, vector<8x14xf32> -> vector<8x16xf32>
    %c2_i32 = arith.constant 2 : i32
    %28 = vector.broadcast %c2_i32 : i32 to vector<8x16xi32>
    %29 = arith.cmpi sge, %0, %28 : vector<8x16xi32>
    %c16_i32_11 = arith.constant 16 : i32
    %30 = vector.broadcast %c16_i32_11 : i32 to vector<8x16xi32>
    %31 = arith.cmpi slt, %0, %30 : vector<8x16xi32>
    %32 = arith.andi %29, %31 : vector<8x16xi1>
    %cst_12 = arith.constant 0.000000e+00 : f32
    %33 = vector.broadcast %cst_12 : f32 to vector<8x16xf32>
    %34 = arith.select %32, %27, %33 : vector<8x16xi1>, vector<8x16xf32>
    %35 = arith.addf %23, %34 : vector<8x16xf32>
    %36 = vector.extract_strided_slice %10 {offsets = [24, 0], sizes = [8, 16], strides = [1, 1]} : vector<56x16xf32> to vector<8x16xf32>
    %37 = vector.extract_strided_slice %36 {offsets = [0, 13], sizes = [8, 3], strides = [1, 1]} : vector<8x16xf32> to vector<8x3xf32>
    %38 = vector.extract_strided_slice %36 {offsets = [0, 0], sizes = [8, 13], strides = [1, 1]} : vector<8x16xf32> to vector<8x13xf32>
    %39 = tpu.concatenate %37, %38 in 1 : vector<8x3xf32>, vector<8x13xf32> -> vector<8x16xf32>
    %c3_i32 = arith.constant 3 : i32
    %40 = vector.broadcast %c3_i32 : i32 to vector<8x16xi32>
    %41 = arith.cmpi sge, %0, %40 : vector<8x16xi32>
    %c16_i32_13 = arith.constant 16 : i32
    %42 = vector.broadcast %c16_i32_13 : i32 to vector<8x16xi32>
    %43 = arith.cmpi slt, %0, %42 : vector<8x16xi32>
    %44 = arith.andi %41, %43 : vector<8x16xi1>
    %cst_14 = arith.constant 0.000000e+00 : f32
    %45 = vector.broadcast %cst_14 : f32 to vector<8x16xf32>
    %46 = arith.select %44, %39, %45 : vector<8x16xi1>, vector<8x16xf32>
    %47 = arith.addf %35, %46 : vector<8x16xf32>
    %48 = vector.extract_strided_slice %10 {offsets = [32, 0], sizes = [8, 16], strides = [1, 1]} : vector<56x16xf32> to vector<8x16xf32>
    %49 = vector.extract_strided_slice %48 {offsets = [0, 12], sizes = [8, 4], strides = [1, 1]} : vector<8x16xf32> to vector<8x4xf32>
    %50 = vector.extract_strided_slice %48 {offsets = [0, 0], sizes = [8, 12], strides = [1, 1]} : vector<8x16xf32> to vector<8x12xf32>
    %51 = tpu.concatenate %49, %50 in 1 : vector<8x4xf32>, vector<8x12xf32> -> vector<8x16xf32>
    %c4_i32 = arith.constant 4 : i32
    %52 = vector.broadcast %c4_i32 : i32 to vector<8x16xi32>
    %53 = arith.cmpi sge, %0, %52 : vector<8x16xi32>
    %c16_i32_15 = arith.constant 16 : i32
    %54 = vector.broadcast %c16_i32_15 : i32 to vector<8x16xi32>
    %55 = arith.cmpi slt, %0, %54 : vector<8x16xi32>
    %56 = arith.andi %53, %55 : vector<8x16xi1>
    %cst_16 = arith.constant 0.000000e+00 : f32
    %57 = vector.broadcast %cst_16 : f32 to vector<8x16xf32>
    %58 = arith.select %56, %51, %57 : vector<8x16xi1>, vector<8x16xf32>
    %59 = arith.addf %47, %58 : vector<8x16xf32>
    %60 = vector.extract_strided_slice %10 {offsets = [40, 0], sizes = [8, 16], strides = [1, 1]} : vector<56x16xf32> to vector<8x16xf32>
    %61 = vector.extract_strided_slice %60 {offsets = [0, 10], sizes = [8, 6], strides = [1, 1]} : vector<8x16xf32> to vector<8x6xf32>
    %62 = vector.extract_strided_slice %60 {offsets = [0, 0], sizes = [8, 10], strides = [1, 1]} : vector<8x16xf32> to vector<8x10xf32>
    %63 = tpu.concatenate %61, %62 in 1 : vector<8x6xf32>, vector<8x10xf32> -> vector<8x16xf32>
    %c6_i32 = arith.constant 6 : i32
    %64 = vector.broadcast %c6_i32 : i32 to vector<8x16xi32>
    %65 = arith.cmpi sge, %0, %64 : vector<8x16xi32>
    %c16_i32_17 = arith.constant 16 : i32
    %66 = vector.broadcast %c16_i32_17 : i32 to vector<8x16xi32>
    %67 = arith.cmpi slt, %0, %66 : vector<8x16xi32>
    %68 = arith.andi %65, %67 : vector<8x16xi1>
    %cst_18 = arith.constant 0.000000e+00 : f32
    %69 = vector.broadcast %cst_18 : f32 to vector<8x16xf32>
    %70 = arith.select %68, %63, %69 : vector<8x16xi1>, vector<8x16xf32>
    %71 = arith.addf %59, %70 : vector<8x16xf32>
    %72 = vector.extract_strided_slice %10 {offsets = [48, 0], sizes = [8, 16], strides = [1, 1]} : vector<56x16xf32> to vector<8x16xf32>
    %73 = vector.extract_strided_slice %72 {offsets = [0, 8], sizes = [8, 8], strides = [1, 1]} : vector<8x16xf32> to vector<8x8xf32>
    %74 = vector.extract_strided_slice %72 {offsets = [0, 0], sizes = [8, 8], strides = [1, 1]} : vector<8x16xf32> to vector<8x8xf32>
    %75 = tpu.concatenate %73, %74 in 1 : vector<8x8xf32>, vector<8x8xf32> -> vector<8x16xf32>
    %c8_i32 = arith.constant 8 : i32
    %76 = vector.broadcast %c8_i32 : i32 to vector<8x16xi32>
    %77 = arith.cmpi sge, %0, %76 : vector<8x16xi32>
    %c16_i32_19 = arith.constant 16 : i32
    %78 = vector.broadcast %c16_i32_19 : i32 to vector<8x16xi32>
    %79 = arith.cmpi slt, %0, %78 : vector<8x16xi32>
    %80 = arith.andi %77, %79 : vector<8x16xi1>
    %cst_20 = arith.constant 0.000000e+00 : f32
    %81 = vector.broadcast %cst_20 : f32 to vector<8x16xf32>
    %82 = arith.select %80, %75, %81 : vector<8x16xi1>, vector<8x16xf32>
    %83 = arith.addf %71, %82 : vector<8x16xf32>
    %cst_21 = arith.constant 0.000000e+00 : f32
    %84 = vector.broadcast %cst_21 : f32 to vector<8x16xf32>
    %85 = arith.cmpf ogt, %83, %84 : vector<8x16xf32>
    %cst_22 = arith.constant 0.000000e+00 : f32
    %86 = vector.broadcast %cst_22 : f32 to vector<8x16xf32>
    %87 = arith.minimumf %83, %86 : vector<8x16xf32>
    %88 = math.exp %87 : vector<8x16xf32>
    %cst_23 = arith.constant 1.000000e+00 : f32
    %89 = vector.broadcast %cst_23 : f32 to vector<8x16xf32>
    %90 = arith.subf %88, %89 : vector<8x16xf32>
    %91 = arith.select %85, %83, %90 : vector<8x16xi1>, vector<8x16xf32>
    %92 = tpu.concatenate %91, %2 in 0 : vector<8x16xf32>, vector<4x16xf32> -> vector<12x16xf32>
    %93 = arith.truncf %92 : vector<12x16xf32> to vector<12x16xbf16>
    %cst_24 = arith.constant dense<0.000000e+00> : vector<4x16xf32>
    %94 = tpu.matmul %5, %93, %cst_24 {dimension_numbers = #tpu.dot_dimension_numbers<[1], [0], [0], [1], [0, 0, 1, 1], [], []>} : vector<4x12xbf16>, vector<12x16xbf16>, vector<4x16xf32> -> vector<4x16xf32>
    %95 = vector.broadcast %6 : vector<4x1xf32> to vector<4x16xf32>
    %96 = arith.addf %94, %95 : vector<4x16xf32>
    %c0_25 = arith.constant 0 : index
    %c0_26 = arith.constant 0 : index
    %97 = vector.load %arg6[%c0_25, %c0_26] : memref<48x4xbf16, #tpu.memory_space<vmem>>, vector<48x4xbf16>
    %c0_27 = arith.constant 0 : index
    %c0_28 = arith.constant 0 : index
    %98 = vector.load %arg7[%c0_27, %c0_28] : memref<48x1xf32, #tpu.memory_space<vmem>>, vector<48x1xf32>
    %c0_29 = arith.constant 0 : index
    %c0_30 = arith.constant 0 : index
    %99 = vector.load %arg8[%c0_29, %c0_30] : memref<4x12xbf16, #tpu.memory_space<vmem>>, vector<4x12xbf16>
    %c0_31 = arith.constant 0 : index
    %c0_32 = arith.constant 0 : index
    %100 = vector.load %arg9[%c0_31, %c0_32] : memref<4x1xf32, #tpu.memory_space<vmem>>, vector<4x1xf32>
    %101 = arith.truncf %96 : vector<4x16xf32> to vector<4x16xbf16>
    %cst_33 = arith.constant dense<0.000000e+00> : vector<48x16xf32>
    %102 = tpu.matmul %97, %101, %cst_33 {dimension_numbers = #tpu.dot_dimension_numbers<[1], [0], [0], [1], [0, 0, 1, 1], [], []>} : vector<48x4xbf16>, vector<4x16xbf16>, vector<48x16xf32> -> vector<48x16xf32>
    %103 = vector.broadcast %98 : vector<48x1xf32> to vector<48x16xf32>
    %104 = arith.addf %102, %103 : vector<48x16xf32>
    %105 = vector.extract_strided_slice %104 {offsets = [0, 0], sizes = [8, 16], strides = [1, 1]} : vector<48x16xf32> to vector<8x16xf32>
    %106 = vector.extract_strided_slice %104 {offsets = [8, 0], sizes = [8, 16], strides = [1, 1]} : vector<48x16xf32> to vector<8x16xf32>
    %107 = vector.extract_strided_slice %106 {offsets = [0, 14], sizes = [8, 2], strides = [1, 1]} : vector<8x16xf32> to vector<8x2xf32>
    %108 = vector.extract_strided_slice %106 {offsets = [0, 0], sizes = [8, 14], strides = [1, 1]} : vector<8x16xf32> to vector<8x14xf32>
    %109 = tpu.concatenate %107, %108 in 1 : vector<8x2xf32>, vector<8x14xf32> -> vector<8x16xf32>
    %c2_i32_34 = arith.constant 2 : i32
    %110 = vector.broadcast %c2_i32_34 : i32 to vector<8x16xi32>
    %111 = arith.cmpi sge, %0, %110 : vector<8x16xi32>
    %c16_i32_35 = arith.constant 16 : i32
    %112 = vector.broadcast %c16_i32_35 : i32 to vector<8x16xi32>
    %113 = arith.cmpi slt, %0, %112 : vector<8x16xi32>
    %114 = arith.andi %111, %113 : vector<8x16xi1>
    %cst_36 = arith.constant 0.000000e+00 : f32
    %115 = vector.broadcast %cst_36 : f32 to vector<8x16xf32>
    %116 = arith.select %114, %109, %115 : vector<8x16xi1>, vector<8x16xf32>
    %117 = arith.addf %105, %116 : vector<8x16xf32>
    %118 = vector.extract_strided_slice %104 {offsets = [16, 0], sizes = [8, 16], strides = [1, 1]} : vector<48x16xf32> to vector<8x16xf32>
    %119 = vector.extract_strided_slice %118 {offsets = [0, 12], sizes = [8, 4], strides = [1, 1]} : vector<8x16xf32> to vector<8x4xf32>
    %120 = vector.extract_strided_slice %118 {offsets = [0, 0], sizes = [8, 12], strides = [1, 1]} : vector<8x16xf32> to vector<8x12xf32>
    %121 = tpu.concatenate %119, %120 in 1 : vector<8x4xf32>, vector<8x12xf32> -> vector<8x16xf32>
    %c4_i32_37 = arith.constant 4 : i32
    %122 = vector.broadcast %c4_i32_37 : i32 to vector<8x16xi32>
    %123 = arith.cmpi sge, %0, %122 : vector<8x16xi32>
    %c16_i32_38 = arith.constant 16 : i32
    %124 = vector.broadcast %c16_i32_38 : i32 to vector<8x16xi32>
    %125 = arith.cmpi slt, %0, %124 : vector<8x16xi32>
    %126 = arith.andi %123, %125 : vector<8x16xi1>
    %cst_39 = arith.constant 0.000000e+00 : f32
    %127 = vector.broadcast %cst_39 : f32 to vector<8x16xf32>
    %128 = arith.select %126, %121, %127 : vector<8x16xi1>, vector<8x16xf32>
    %129 = arith.addf %117, %128 : vector<8x16xf32>
    %130 = vector.extract_strided_slice %104 {offsets = [24, 0], sizes = [8, 16], strides = [1, 1]} : vector<48x16xf32> to vector<8x16xf32>
    %131 = vector.extract_strided_slice %130 {offsets = [0, 10], sizes = [8, 6], strides = [1, 1]} : vector<8x16xf32> to vector<8x6xf32>
    %132 = vector.extract_strided_slice %130 {offsets = [0, 0], sizes = [8, 10], strides = [1, 1]} : vector<8x16xf32> to vector<8x10xf32>
    %133 = tpu.concatenate %131, %132 in 1 : vector<8x6xf32>, vector<8x10xf32> -> vector<8x16xf32>
    %c6_i32_40 = arith.constant 6 : i32
    %134 = vector.broadcast %c6_i32_40 : i32 to vector<8x16xi32>
    %135 = arith.cmpi sge, %0, %134 : vector<8x16xi32>
    %c16_i32_41 = arith.constant 16 : i32
    %136 = vector.broadcast %c16_i32_41 : i32 to vector<8x16xi32>
    %137 = arith.cmpi slt, %0, %136 : vector<8x16xi32>
    %138 = arith.andi %135, %137 : vector<8x16xi1>
    %cst_42 = arith.constant 0.000000e+00 : f32
    %139 = vector.broadcast %cst_42 : f32 to vector<8x16xf32>
    %140 = arith.select %138, %133, %139 : vector<8x16xi1>, vector<8x16xf32>
    %141 = arith.addf %129, %140 : vector<8x16xf32>
    %142 = vector.extract_strided_slice %104 {offsets = [32, 0], sizes = [8, 16], strides = [1, 1]} : vector<48x16xf32> to vector<8x16xf32>
    %143 = vector.extract_strided_slice %142 {offsets = [0, 8], sizes = [8, 8], strides = [1, 1]} : vector<8x16xf32> to vector<8x8xf32>
    %144 = vector.extract_strided_slice %142 {offsets = [0, 0], sizes = [8, 8], strides = [1, 1]} : vector<8x16xf32> to vector<8x8xf32>
    %145 = tpu.concatenate %143, %144 in 1 : vector<8x8xf32>, vector<8x8xf32> -> vector<8x16xf32>
    %c8_i32_43 = arith.constant 8 : i32
    %146 = vector.broadcast %c8_i32_43 : i32 to vector<8x16xi32>
    %147 = arith.cmpi sge, %0, %146 : vector<8x16xi32>
    %c16_i32_44 = arith.constant 16 : i32
    %148 = vector.broadcast %c16_i32_44 : i32 to vector<8x16xi32>
    %149 = arith.cmpi slt, %0, %148 : vector<8x16xi32>
    %150 = arith.andi %147, %149 : vector<8x16xi1>
    %cst_45 = arith.constant 0.000000e+00 : f32
    %151 = vector.broadcast %cst_45 : f32 to vector<8x16xf32>
    %152 = arith.select %150, %145, %151 : vector<8x16xi1>, vector<8x16xf32>
    %153 = arith.addf %141, %152 : vector<8x16xf32>
    %154 = vector.extract_strided_slice %104 {offsets = [40, 0], sizes = [8, 16], strides = [1, 1]} : vector<48x16xf32> to vector<8x16xf32>
    %155 = vector.extract_strided_slice %154 {offsets = [0, 4], sizes = [8, 12], strides = [1, 1]} : vector<8x16xf32> to vector<8x12xf32>
    %156 = vector.extract_strided_slice %154 {offsets = [0, 0], sizes = [8, 4], strides = [1, 1]} : vector<8x16xf32> to vector<8x4xf32>
    %157 = tpu.concatenate %155, %156 in 1 : vector<8x12xf32>, vector<8x4xf32> -> vector<8x16xf32>
    %c12_i32 = arith.constant 12 : i32
    %158 = vector.broadcast %c12_i32 : i32 to vector<8x16xi32>
    %159 = arith.cmpi sge, %0, %158 : vector<8x16xi32>
    %c16_i32_46 = arith.constant 16 : i32
    %160 = vector.broadcast %c16_i32_46 : i32 to vector<8x16xi32>
    %161 = arith.cmpi slt, %0, %160 : vector<8x16xi32>
    %162 = arith.andi %159, %161 : vector<8x16xi1>
    %cst_47 = arith.constant 0.000000e+00 : f32
    %163 = vector.broadcast %cst_47 : f32 to vector<8x16xf32>
    %164 = arith.select %162, %157, %163 : vector<8x16xi1>, vector<8x16xf32>
    %165 = arith.addf %153, %164 : vector<8x16xf32>
    %cst_48 = arith.constant 0.000000e+00 : f32
    %166 = vector.broadcast %cst_48 : f32 to vector<8x16xf32>
    %167 = arith.cmpf ogt, %165, %166 : vector<8x16xf32>
    %cst_49 = arith.constant 0.000000e+00 : f32
    %168 = vector.broadcast %cst_49 : f32 to vector<8x16xf32>
    %169 = arith.minimumf %165, %168 : vector<8x16xf32>
    %170 = math.exp %169 : vector<8x16xf32>
    %cst_50 = arith.constant 1.000000e+00 : f32
    %171 = vector.broadcast %cst_50 : f32 to vector<8x16xf32>
    %172 = arith.subf %170, %171 : vector<8x16xf32>
    %173 = arith.select %167, %165, %172 : vector<8x16xi1>, vector<8x16xf32>
    %174 = tpu.concatenate %173, %96 in 0 : vector<8x16xf32>, vector<4x16xf32> -> vector<12x16xf32>
    %175 = arith.truncf %174 : vector<12x16xf32> to vector<12x16xbf16>
    %cst_51 = arith.constant dense<0.000000e+00> : vector<4x16xf32>
    %176 = tpu.matmul %99, %175, %cst_51 {dimension_numbers = #tpu.dot_dimension_numbers<[1], [0], [0], [1], [0, 0, 1, 1], [], []>} : vector<4x12xbf16>, vector<12x16xbf16>, vector<4x16xf32> -> vector<4x16xf32>
    %177 = vector.broadcast %100 : vector<4x1xf32> to vector<4x16xf32>
    %178 = arith.addf %176, %177 : vector<4x16xf32>
    %c0_52 = arith.constant 0 : index
    %c0_53 = arith.constant 0 : index
    %c0_54 = arith.constant 0 : index
    %179 = vector.load %arg10[%c0_52, %c0_53, %c0_54] : memref<1x4x16xf32, #tpu.memory_space<vmem>>, vector<1x4x16xf32>
    %180 = vector.shape_cast %179 : vector<1x4x16xf32> to vector<4x16xf32>
    %181 = vector.shape_cast %178 : vector<4x16xf32> to vector<1x4x16xf32>
    tpu.vector_store %arg10[%c0_52, %c0_53, %c0_54], %181 {strides = array<i32>} : memref<1x4x16xf32, #tpu.memory_space<vmem>>, vector<1x4x16xf32>,
    return
  }
  func.func @transform_0(%arg0: i32) -> (i32, i32, i32) {
    %c0_i32 = arith.constant 0 : i32
    %c0_i32_0 = arith.constant 0 : i32
    %c0_i32_1 = arith.constant 0 : i32
    return %arg0, %c0_i32, %c0_i32_0 : i32, i32, i32
  }
  func.func @transform_1(%arg0: i32) -> (i32, i32) {
    %c0_i32 = arith.constant 0 : i32
    %c0_i32_0 = arith.constant 0 : i32
    %c0_i32_1 = arith.constant 0 : i32
    return %c0_i32, %c0_i32_0 : i32, i32
  }
  func.func @transform_2(%arg0: i32) -> (i32, i32) {
    %c0_i32 = arith.constant 0 : i32
    %c0_i32_0 = arith.constant 0 : i32
    %c0_i32_1 = arith.constant 0 : i32
    return %c0_i32, %c0_i32_0 : i32, i32
  }
  func.func @transform_3(%arg0: i32) -> (i32, i32) {
    %c0_i32 = arith.constant 0 : i32
    %c0_i32_0 = arith.constant 0 : i32
    %c0_i32_1 = arith.constant 0 : i32
    return %c0_i32, %c0_i32_0 : i32, i32
  }
  func.func @transform_4(%arg0: i32) -> (i32, i32) {
    %c0_i32 = arith.constant 0 : i32
    %c0_i32_0 = arith.constant 0 : i32
    %c0_i32_1 = arith.constant 0 : i32
    return %c0_i32, %c0_i32_0 : i32, i32
  }
  func.func @transform_5(%arg0: i32) -> (i32, i32) {
    %c0_i32 = arith.constant 0 : i32
    %c0_i32_0 = arith.constant 0 : i32
    %c0_i32_1 = arith.constant 0 : i32
    return %c0_i32, %c0_i32_0 : i32, i32
  }
  func.func @transform_6(%arg0: i32) -> (i32, i32) {
    %c0_i32 = arith.constant 0 : i32
    %c0_i32_0 = arith.constant 0 : i32
    %c0_i32_1 = arith.constant 0 : i32
    return %c0_i32, %c0_i32_0 : i32, i32
  }
  func.func @transform_7(%arg0: i32) -> (i32, i32) {
    %c0_i32 = arith.constant 0 : i32
    %c0_i32_0 = arith.constant 0 : i32
    %c0_i32_1 = arith.constant 0 : i32
    return %c0_i32, %c0_i32_0 : i32, i32
  }
  func.func @transform_8(%arg0: i32) -> (i32, i32) {
    %c0_i32 = arith.constant 0 : i32
    %c0_i32_0 = arith.constant 0 : i32
    %c0_i32_1 = arith.constant 0 : i32
    return %c0_i32, %c0_i32_0 : i32, i32
  }
  func.func @transform_9(%arg0: i32) -> (i32, i32, i32) {
    %c0_i32 = arith.constant 0 : i32
    %c0_i32_0 = arith.constant 0 : i32
    %c0_i32_1 = arith.constant 0 : i32
    return %arg0, %c0_i32, %c0_i32_0 : i32, i32, i32
  }
}

</mosaic_0001>

<llo_original>
// kernel: tpu_custom_call.1
$region0: #{tpu_custom_call.1}
  #allocation0 [shape = 'u32[]', space=smem, size = 0x4, offset = 0x4, fixed_abs, tag = 'smem constant byte address 0x4 - core index']
  #allocation1 [shape = 'u32[72,128]{1,0:T(1,128)}', space=vmem, size = 0x9000, scoped, tag = 'internal scratch']
  %s0 = inlined_call_operand.vmem [shape: f32[2,4,16], index: 0, kind: input, shape index: {}]
  %s1 = inlined_call_operand.vmem [shape: bf16[56,4], index: 1, kind: input, shape index: {}]
  %s2 = inlined_call_operand.vmem [shape: f32[56,1], index: 2, kind: input, shape index: {}]
  %s3 = inlined_call_operand.vmem [shape: bf16[4,12], index: 3, kind: input, shape index: {}]
  %s4 = inlined_call_operand.vmem [shape: f32[4,1], index: 4, kind: input, shape index: {}]
  %s5 = inlined_call_operand.vmem [shape: bf16[48,4], index: 5, kind: input, shape index: {}]
  %s6 = inlined_call_operand.vmem [shape: f32[48,1], index: 6, kind: input, shape index: {}]
  %s7 = inlined_call_operand.vmem [shape: bf16[4,12], index: 7, kind: input, shape index: {}]
  %s8 = inlined_call_operand.vmem [shape: f32[4,1], index: 8, kind: input, shape index: {}]
  %s9 = inlined_call_operand.hbm [shape: f32[2,4,16], index: 9, kind: output, shape index: {}]
  %s10 = sld [smem:[#allocation0]]
  $region69: #{tpu_custom_call.1} parent=0
    _
  %s12 = ssub.s32 1, %s10
  %s13 = scalar_select 0, %s12, %s10
  $region1: #{tpu_custom_call.1} parent=0
    #allocation2 [shape = 'u8[4096]{0}', space=vmem, size = 0x1000, scoped, tag = 'output window, operand 0']
    #allocation3 [shape = 's32[2]{0}', space=sflag, size = 0x8, scoped, tag = 'scoped memory for tpu_custom_call.1']
    %14 = vsyncpa [#allocation3], 0
    %s15 = scalar_lea.sflag [#allocation3], 1
    %16 = vsyncpa %s15, 0
    loop: start=0, step=1, limit=4
    $region2: #{tpu_custom_call.1} parent=1 // loop_pre_header
      _
    $region3: #{tpu_custom_call.1} parent=1 // loop_header
      %s18 = sphi 0, %s22
      %p19 = scmp.ge.s32.totalorder %s18, 4
      %s28 = sphi 0, %s30
      %s31 = sphi 0, %s28
      %s32 = sphi 0, %s31
      %s48 = sphi 0, %s32
      %s52 = sphi 0, %s52
      %s54 = sphi 0, %s52
      %s55 = sphi 0, %s54
      %s69 = sphi 0, %s55
      %s73 = sphi 0, %s73
      %s75 = sphi 0, %s73
      %s76 = sphi 0, %s75
      %s90 = sphi 0, %s76
      %s94 = sphi 0, %s94
      %s96 = sphi 0, %s94
      %s97 = sphi 0, %s96
      %s111 = sphi 0, %s97
      %s115 = sphi 0, %s115
      %s117 = sphi 0, %s115
      %s118 = sphi 0, %s117
      %s132 = sphi 0, %s118
      %s136 = sphi 0, %s136
      %s138 = sphi 0, %s136
      %s139 = sphi 0, %s138
      %s153 = sphi 0, %s139
      %s157 = sphi 0, %s157
      %s159 = sphi 0, %s157
      %s160 = sphi 0, %s159
      %s174 = sphi 0, %s160
      %s178 = sphi 0, %s178
      %s180 = sphi 0, %s178
      %s181 = sphi 0, %s180
      %s195 = sphi 0, %s181
      %s199 = sphi 0, %s199
      %s201 = sphi 0, %s199
      %s202 = sphi 0, %s201
      %s216 = sphi 0, %s202
      %s222 = sphi 0, %s224
      %s225 = sphi 0, %s222
      %s226 = sphi 0, %s225
      %s242 = sphi 0, %s226
    $region4: #{tpu_custom_call.1} parent=1 // loop_header_branch
      %21 = sbr.rel (%p19) target = $region8
    $region5: #{tpu_custom_call.1} parent=1 // loop_body
      %s23 = ssub.s32 %s18, 1
      %s24 = ssub.s32 %s18, 2
      %s25 = sadd.s32 %s18, 1
      %s26 = ssub.s32 %s18, %s25
      %p27 = scmp.eq.s32.totalorder %s26, 0
      %s29 = sadd.s32 %s28, 1
      %s30 = scalar_select %p27, %s28, %s29
      %p33 = pneg %p27
      %p34 = scmp.eq.s32.totalorder %s18, 1
      %p35 = por %p33, %p34
      %p36 = scmp.ne.s32.totalorder %s28, %s31
      %p37 = scmp.eq.s32.totalorder %s18, 0
      %p38 = por %p36, %p37
      %p39 = scmp.ne.s32.totalorder %s28, %s31
      %p40 = scmp.eq.s32.totalorder %s23, 1
      %p41 = por %p39, %p40
      %p42 = scmp.ne.s32.totalorder %s31, %s32
      %p43 = scmp.eq.s32.totalorder %s23, 0
      %p44 = por %p42, %p43
      %p45 = scmp.ne.s32.totalorder %s31, %s32
      %p46 = scmp.eq.s32.totalorder %s24, 1
      %p47 = por %p45, %p46
      %p49 = scmp.ne.s32.totalorder %s32, %s48
      %p50 = scmp.eq.s32.totalorder %s24, 0
      %p51 = por %p49, %p50
      %s53 = sadd.s32 %s52, 1
      %p56 = scmp.eq.s32.totalorder %s18, 1
      %p57 = scmp.ne.s32.totalorder %s52, %s54
      %p58 = scmp.eq.s32.totalorder %s18, 0
      %p59 = por %p57, %p58
      %p60 = scmp.ne.s32.totalorder %s52, %s54
      %p61 = scmp.eq.s32.totalorder %s23, 1
      %p62 = por %p60, %p61
      %p63 = scmp.ne.s32.totalorder %s54, %s55
      %p64 = scmp.eq.s32.totalorder %s23, 0
      %p65 = por %p63, %p64
      %p66 = scmp.ne.s32.totalorder %s54, %s55
      %p67 = scmp.eq.s32.totalorder %s24, 1
      %p68 = por %p66, %p67
      %p70 = scmp.ne.s32.totalorder %s55, %s69
      %p71 = scmp.eq.s32.totalorder %s24, 0
      %p72 = por %p70, %p71
      %s74 = sadd.s32 %s73, 1
      %p77 = scmp.eq.s32.totalorder %s18, 1
      %p78 = scmp.ne.s32.totalorder %s73, %s75
      %p79 = scmp.eq.s32.totalorder %s18, 0
      %p80 = por %p78, %p79
      %p81 = scmp.ne.s32.totalorder %s73, %s75
      %p82 = scmp.eq.s32.totalorder %s23, 1
      %p83 = por %p81, %p82
      %p84 = scmp.ne.s32.totalorder %s75, %s76
      %p85 = scmp.eq.s32.totalorder %s23, 0
      %p86 = por %p84, %p85
      %p87 = scmp.ne.s32.totalorder %s75, %s76
      %p88 = scmp.eq.s32.totalorder %s24, 1
      %p89 = por %p87, %p88
      %p91 = scmp.ne.s32.totalorder %s76, %s90
      %p92 = scmp.eq.s32.totalorder %s24, 0
      %p93 = por %p91, %p92
      %s95 = sadd.s32 %s94, 1
      %p98 = scmp.eq.s32.totalorder %s18, 1
      %p99 = scmp.ne.s32.totalorder %s94, %s96
      %p100 = scmp.eq.s32.totalorder %s18, 0
      %p101 = por %p99, %p100
      %p102 = scmp.ne.s32.totalorder %s94, %s96
      %p103 = scmp.eq.s32.totalorder %s23, 1
      %p104 = por %p102, %p103
      %p105 = scmp.ne.s32.totalorder %s96, %s97
      %p106 = scmp.eq.s32.totalorder %s23, 0
      %p107 = por %p105, %p106
      %p108 = scmp.ne.s32.totalorder %s96, %s97
      %p109 = scmp.eq.s32.totalorder %s24, 1
      %p110 = por %p108, %p109
      %p112 = scmp.ne.s32.totalorder %s97, %s111
      %p113 = scmp.eq.s32.totalorder %s24, 0
      %p114 = por %p112, %p113
      %s116 = sadd.s32 %s115, 1
      %p119 = scmp.eq.s32.totalorder %s18, 1
      %p120 = scmp.ne.s32.totalorder %s115, %s117
      %p121 = scmp.eq.s32.totalorder %s18, 0
      %p122 = por %p120, %p121
      %p123 = scmp.ne.s32.totalorder %s115, %s117
      %p124 = scmp.eq.s32.totalorder %s23, 1
      %p125 = por %p123, %p124
      %p126 = scmp.ne.s32.totalorder %s117, %s118
      %p127 = scmp.eq.s32.totalorder %s23, 0
      %p128 = por %p126, %p127
      %p129 = scmp.ne.s32.totalorder %s117, %s118
      %p130 = scmp.eq.s32.totalorder %s24, 1
      %p131 = por %p129, %p130
      %p133 = scmp.ne.s32.totalorder %s118, %s132
      %p134 = scmp.eq.s32.totalorder %s24, 0
      %p135 = por %p133, %p134
      %s137 = sadd.s32 %s136, 1
      %p140 = scmp.eq.s32.totalorder %s18, 1
      %p141 = scmp.ne.s32.totalorder %s136, %s138
      %p142 = scmp.eq.s32.totalorder %s18, 0
      %p143 = por %p141, %p142
      %p144 = scmp.ne.s32.totalorder %s136, %s138
      %p145 = scmp.eq.s32.totalorder %s23, 1
      %p146 = por %p144, %p145
      %p147 = scmp.ne.s32.totalorder %s138, %s139
      %p148 = scmp.eq.s32.totalorder %s23, 0
      %p149 = por %p147, %p148
      %p150 = scmp.ne.s32.totalorder %s138, %s139
      %p151 = scmp.eq.s32.totalorder %s24, 1
      %p152 = por %p150, %p151
      %p154 = scmp.ne.s32.totalorder %s139, %s153
      %p155 = scmp.eq.s32.totalorder %s24, 0
      %p156 = por %p154, %p155
      %s158 = sadd.s32 %s157, 1
      %p161 = scmp.eq.s32.totalorder %s18, 1
      %p162 = scmp.ne.s32.totalorder %s157, %s159
      %p163 = scmp.eq.s32.totalorder %s18, 0
      %p164 = por %p162, %p163
      %p165 = scmp.ne.s32.totalorder %s157, %s159
      %p166 = scmp.eq.s32.totalorder %s23, 1
      %p167 = por %p165, %p166
      %p168 = scmp.ne.s32.totalorder %s159, %s160
      %p169 = scmp.eq.s32.totalorder %s23, 0
      %p170 = por %p168, %p169
      %p171 = scmp.ne.s32.totalorder %s159, %s160
      %p172 = scmp.eq.s32.totalorder %s24, 1
      %p173 = por %p171, %p172
      %p175 = scmp.ne.s32.totalorder %s160, %s174
      %p176 = scmp.eq.s32.totalorder %s24, 0
      %p177 = por %p175, %p176
      %s179 = sadd.s32 %s178, 1
      %p182 = scmp.eq.s32.totalorder %s18, 1
      %p183 = scmp.ne.s32.totalorder %s178, %s180
      %p184 = scmp.eq.s32.totalorder %s18, 0
      %p185 = por %p183, %p184
      %p186 = scmp.ne.s32.totalorder %s178, %s180
      %p187 = scmp.eq.s32.totalorder %s23, 1
      %p188 = por %p186, %p187
      %p189 = scmp.ne.s32.totalorder %s180, %s181
      %p190 = scmp.eq.s32.totalorder %s23, 0
      %p191 = por %p189, %p190
      %p192 = scmp.ne.s32.totalorder %s180, %s181
      %p193 = scmp.eq.s32.totalorder %s24, 1
      %p194 = por %p192, %p193
      %p196 = scmp.ne.s32.totalorder %s181, %s195
      %p197 = scmp.eq.s32.totalorder %s24, 0
      %p198 = por %p196, %p197
      %s200 = sadd.s32 %s199, 1
      %p203 = scmp.eq.s32.totalorder %s18, 1
      %p204 = scmp.ne.s32.totalorder %s199, %s201
      %p205 = scmp.eq.s32.totalorder %s18, 0
      %p206 = por %p204, %p205
      %p207 = scmp.ne.s32.totalorder %s199, %s201
      %p208 = scmp.eq.s32.totalorder %s23, 1
      %p209 = por %p207, %p208
      %p210 = scmp.ne.s32.totalorder %s201, %s202
      %p211 = scmp.eq.s32.totalorder %s23, 0
      %p212 = por %p210, %p211
      %p213 = scmp.ne.s32.totalorder %s201, %s202
      %p214 = scmp.eq.s32.totalorder %s24, 1
      %p215 = por %p213, %p214
      %p217 = scmp.ne.s32.totalorder %s202, %s216
      %p218 = scmp.eq.s32.totalorder %s24, 0
      %p219 = por %p217, %p218
      %s220 = ssub.s32 %s18, %s25
      %p221 = scmp.eq.s32.totalorder %s220, 0
      %s223 = sadd.s32 %s222, 1
      %s224 = scalar_select %p221, %s222, %s223
      %p227 = pneg %p221
      %p228 = scmp.eq.s32.totalorder %s18, 1
      %p229 = por %p227, %p228
      %p230 = scmp.ne.s32.totalorder %s222, %s225
      %p231 = scmp.eq.s32.totalorder %s18, 0
      %p232 = por %p230, %p231
      %p233 = scmp.ne.s32.totalorder %s222, %s225
      %p234 = scmp.eq.s32.totalorder %s23, 1
      %p235 = por %p233, %p234
      %p236 = scmp.ne.s32.totalorder %s225, %s226
      %p237 = scmp.eq.s32.totalorder %s23, 0
      %p238 = por %p236, %p237
      %p239 = scmp.ne.s32.totalorder %s225, %s226
      %p240 = scmp.eq.s32.totalorder %s24, 1
      %p241 = por %p239, %p240
      %p243 = scmp.ne.s32.totalorder %s226, %s242
      %p244 = scmp.eq.s32.totalorder %s24, 0
      %p245 = por %p243, %p244
      %p246 = scmp.le.s32.totalorder 1, %s18
      %p247 = scmp.lt.s32.totalorder %s18, 3
      %p248 = pnand %p246, %p247
      %p249 = pneg %p248
      // Predicated region
      $region9: #{tpu_custom_call.1} parent=5 // pred_check
        _
      $region10: #{tpu_custom_call.1} parent=5 // pred_check_branch
        %251 = sbr.rel (%p248) target = $region12
      $region11: #{tpu_custom_call.1} parent=5 // pred_region
        %s252 = ssub.s32 %s18, 1
        // Predicated region
        $region13: #{tpu_custom_call.1} parent=11 // pred_check
          %p253 = pneg %p65
        $region14: #{tpu_custom_call.1} parent=11 // pred_check_branch
          %255 = sbr.rel (%p253) target = $region16
        $region15: #{tpu_custom_call.1} parent=11 // pred_region
          _
        $region16: #{tpu_custom_call.1} parent=11 // pred_fallthru
          _
        // Predicated region
        $region17: #{tpu_custom_call.1} parent=11 // pred_check
          %p256 = pneg %p86
        $region18: #{tpu_custom_call.1} parent=11 // pred_check_branch
          %258 = sbr.rel (%p256) target = $region20
        $region19: #{tpu_custom_call.1} parent=11 // pred_region
          _
        $region20: #{tpu_custom_call.1} parent=11 // pred_fallthru
          _
        // Predicated region
        $region21: #{tpu_custom_call.1} parent=11 // pred_check
          %p259 = pneg %p107
        $region22: #{tpu_custom_call.1} parent=11 // pred_check_branch
          %261 = sbr.rel (%p259) target = $region24
        $region23: #{tpu_custom_call.1} parent=11 // pred_region
          _
        $region24: #{tpu_custom_call.1} parent=11 // pred_fallthru
          _
        // Predicated region
        $region25: #{tpu_custom_call.1} parent=11 // pred_check
          %p262 = pneg %p128
        $region26: #{tpu_custom_call.1} parent=11 // pred_check_branch
          %264 = sbr.rel (%p262) target = $region28
        $region27: #{tpu_custom_call.1} parent=11 // pred_region
          _
        $region28: #{tpu_custom_call.1} parent=11 // pred_fallthru
          _
        // Predicated region
        $region29: #{tpu_custom_call.1} parent=11 // pred_check
          %p265 = pneg %p149
        $region30: #{tpu_custom_call.1} parent=11 // pred_check_branch
          %267 = sbr.rel (%p265) target = $region32
        $region31: #{tpu_custom_call.1} parent=11 // pred_region
          _
        $region32: #{tpu_custom_call.1} parent=11 // pred_fallthru
          _
        // Predicated region
        $region33: #{tpu_custom_call.1} parent=11 // pred_check
          %p268 = pneg %p170
        $region34: #{tpu_custom_call.1} parent=11 // pred_check_branch
          %270 = sbr.rel (%p268) target = $region36
        $region35: #{tpu_custom_call.1} parent=11 // pred_region
          _
        $region36: #{tpu_custom_call.1} parent=11 // pred_fallthru
          _
        // Predicated region
        $region37: #{tpu_custom_call.1} parent=11 // pred_check
          %p271 = pneg %p191
        $region38: #{tpu_custom_call.1} parent=11 // pred_check_branch
          %273 = sbr.rel (%p271) target = $region40
        $region39: #{tpu_custom_call.1} parent=11 // pred_region
          _
        $region40: #{tpu_custom_call.1} parent=11 // pred_fallthru
          _
        // Predicated region
        $region41: #{tpu_custom_call.1} parent=11 // pred_check
          %p274 = pneg %p212
        $region42: #{tpu_custom_call.1} parent=11 // pred_check_branch
          %276 = sbr.rel (%p274) target = $region44
        $region43: #{tpu_custom_call.1} parent=11 // pred_region
          _
        $region44: #{tpu_custom_call.1} parent=11 // pred_fallthru
          _
      $region12: #{tpu_custom_call.1} parent=5 // pred_fallthru
        _
      %p277 = scmp.lt.s32.totalorder %s18, 2
      // Predicated region
      $region45: #{tpu_custom_call.1} parent=5 // pred_check
        %p278 = pneg %p277
      $region46: #{tpu_custom_call.1} parent=5 // pred_check_branch
        %280 = sbr.rel (%p278) target = $region48
      $region47: #{tpu_custom_call.1} parent=5 // pred_region
        // Predicated region
        $region49: #{tpu_custom_call.1} parent=47 // pred_check
          %p281 = pneg %p38
        $region50: #{tpu_custom_call.1} parent=47 // pred_check_branch
          %283 = sbr.rel (%p281) target = $region52
        $region51: #{tpu_custom_call.1} parent=47 // pred_region
          %p284 = scmp.lt.s32.totalorder %s18, 1
          %s285 = scalar_select %p284, %s18, 1
          %s286 = smul.addr %s285, 4
          %s287 = scalar_lea.vmem %s0, %s286
        $region52: #{tpu_custom_call.1} parent=47 // pred_fallthru
          _
      $region48: #{tpu_custom_call.1} parent=5 // pred_fallthru
        _
      %p288 = scmp.le.s32.totalorder 1, %s18
      %p289 = scmp.lt.s32.totalorder %s18, 3
      %p290 = pnand %p288, %p289
      %p291 = pneg %p290
      // Predicated region
      $region53: #{tpu_custom_call.1} parent=5 // pred_check
        _
      $region54: #{tpu_custom_call.1} parent=5 // pred_check_branch
        %293 = sbr.rel (%p290) target = $region56
      $region55: #{tpu_custom_call.1} parent=5 // pred_region
        %s294 = ssub.s32 %s18, 1
        %p295 = scmp.lt.s32.totalorder %s23, 1
        %s296 = scalar_select %p295, %s23, 1
        %s297 = smul.addr %s296, 4
        %s298 = scalar_lea.vmem %s0, %s297
        %p299 = pneg %p44
        %p300 = pneg %p41
        %p301 = pneg %p65
        %p302 = pneg %p62
        %p303 = pneg %p86
        %p304 = pneg %p83
        %p305 = pneg %p107
        %p306 = pneg %p104
        %p307 = pneg %p128
        %p308 = pneg %p125
        %p309 = pneg %p149
        %p310 = pneg %p146
        %p311 = pneg %p170
        %p312 = pneg %p167
        %p313 = pneg %p191
        %p314 = pneg %p188
        %p315 = pneg %p212
        %p316 = pneg %p209
        %p317 = pneg %p238
        %p318 = pneg %p235
        %s319 = sand.u32 %s225, 1
        %s320 = scalar_lea.sflag [#allocation3], %s319
        %s321 = sand.u32 %s225, 1
        %s322 = smul.addr %s321, 4
        %s323 = scalar_lea.vmem [#allocation2], %s322
        %p324 = scmp.lt.s32.totalorder %s23, 1
        %s325 = scalar_select %p324, %s23, 1
        %s326 = smul.addr %s325, 4
        %s327 = scalar_lea.vmem %s0, %s326
        %v329 = vlaneseq
        %v330 = vand.u32 %v329, 127
        %v331 = vld [vmem:[%s327] sm:$0xf]
        %v332 = vld [vmem:[%s1] sm:$0xf]
        %v333 = vld [vmem:[%s1 + $0x4] sm:$0xf]
        %v334 = vld [vmem:[%s1 + $0x8] sm:$0xf]
        %v335 = vld [vmem:[%s1 + $0xc] sm:$0xf]
        %v336 = vld [vmem:[%s1 + $0x10] sm:$0xf]
        %v337 = vld [vmem:[%s1 + $0x14] sm:$0xf]
        %v338 = vld [vmem:[%s1 + $0x18] sm:$0xf]
        %v339 = vld [vmem:[%s2] sm:$0xff]
        %v340 = vld [vmem:[%s2 + $0x8] sm:$0xff]
        %v341 = vld [vmem:[%s2 + $0x10] sm:$0xff]
        %v342 = vld [vmem:[%s2 + $0x18] sm:$0xff]
        %v343 = vld [vmem:[%s2 + $0x20] sm:$0xff]
        %v344 = vld [vmem:[%s2 + $0x28] sm:$0xff]
        %v345 = vld [vmem:[%s2 + $0x30] sm:$0xff]
        %v346 = vld [vmem:[%s3] sm:$0x3]
        %v347 = vld [vmem:[%s4] sm:$0xf]
        %v348 = vpack.c.bf16 %v331, %v331
        %350 = vset.pattern.permute.xlu0 0
        %351 = vperm.xlu0 %350, %v339
        %v352 = vpop.permute.xlu0 %351
        %355 = vset.pattern.permute.xlu0 0
        %356 = vperm.xlu0 %355, %v340
        %v357 = vpop.permute.xlu0 %356
        %360 = vset.pattern.permute.xlu0 0
        %361 = vperm.xlu0 %360, %v341
        %v362 = vpop.permute.xlu0 %361
        %365 = vset.pattern.permute.xlu0 0
        %366 = vperm.xlu0 %365, %v342
        %v367 = vpop.permute.xlu0 %366
        %370 = vset.pattern.permute.xlu0 0
        %371 = vperm.xlu0 %370, %v343
        %v372 = vpop.permute.xlu0 %371
        %375 = vset.pattern.permute.xlu0 0
        %376 = vperm.xlu0 %375, %v344
        %v377 = vpop.permute.xlu0 %376
        %380 = vset.pattern.permute.xlu0 0
        %381 = vperm.xlu0 %380, %v345
        %v382 = vpop.permute.xlu0 %381
        %v391 = vunpack.c.l.b16 %v332
        %v392 = vunpack.c.l.b16 %v333
        %v393 = vunpack.c.l.b16 %v334
        %v394 = vunpack.c.l.b16 %v335
        %v395 = vunpack.c.l.b16 %v336
        %v396 = vunpack.c.l.b16 %v337
        %v397 = vunpack.c.l.b16 %v338
        %v398 = vpack.c.b16 %v392, %v391
        %v399 = vpack.c.b16 %v394, %v393
        %v400 = vpack.c.b16 %v396, %v395
        %v401 = vpack.c.b16 %v397, %v397
        %vm402 = vcmask 31744
        %v404 = vsel %vm402, %v398, 0
        %v407 = vsel %vm402, %v399, 0
        %v410 = vsel %vm402, %v400, 0
        %v413 = vsel %vm402, %v401, 0
        %vm415 = vcmask 1041408
        %v417 = vsel %vm415, %v348, 0
        %419 = vmatpush.bf16.msra.mxu0 0
        %420 = vmatpush.bf16.msra.mxu0 0
        %421 = vmatpush.bf16.msra.mxu0 0
        %422 = vmatpush.bf16.msra.mxu0 0
        %423 = vmatpush.bf16.msra.mxu0 0
        %424 = vmatpush.bf16.msra.mxu0 0
        %425 = vmatpush.bf16.msra.mxu0 0
        %426 = vmatpush.bf16.msra.mxu0 %v417
        %427 = vmatmul.bf16.gmra.mxu0 %v404
        %v428 = vpop.f32.mrf.mxu0
        %v429 = vadd.f32 %v352, %v428
        %v430 = vpop.f32.mrf.mxu0
        %v431 = vadd.f32 %v357, %v430
        %432 = vmatmul.bf16.gmra.mxu0 %v407
        %v433 = vpop.f32.mrf.mxu0
        %v434 = vadd.f32 %v362, %v433
        %v435 = vpop.f32.mrf.mxu0
        %v436 = vadd.f32 %v367, %v435
        %437 = vmatmul.bf16.gmra.mxu0 %v410
        %v438 = vpop.f32.mrf.mxu0
        %v439 = vadd.f32 %v372, %v438
        %v440 = vpop.f32.mrf.mxu0
        %v441 = vadd.f32 %v377, %v440
        %442 = vmatmul.bf16.gmra.mxu0 %v413
        %v443 = vpop.f32.mrf.mxu0
        %v444 = vadd.f32 %v382, %v443
        %v445 = vpop.f32.mrf.mxu0
        %446 = vdwg.mxu0
        %448 = vrot.lane.b32.xlu0 %v431, 113
        %v449 = vpop.permute.xlu0 %448
        %451 = vrot.lane.b32.xlu0 %v431, 1
        %v452 = vpop.permute.xlu0 %451
        %vm454 = vcmask 7168
        %v455 = vsel %vm454, %v449, %v452
        %vm456 = vcmp.ge.s32.totalorder %v330, 1
        %vm457 = vcmp.lt.s32.totalorder %v330, 16
        %vm458 = vmand %vm456, %vm457
        %v459 = vsel %vm458, %v455, 0.0
        %v460 = vadd.f32 %v429, %v459
        %462 = vrot.lane.b32.xlu0 %v434, 114
        %v463 = vpop.permute.xlu0 %462
        %465 = vrot.lane.b32.xlu0 %v434, 2
        %v466 = vpop.permute.xlu0 %465
        %vm468 = vcmask 15360
        %v469 = vsel %vm468, %v463, %v466
        %vm470 = vcmp.ge.s32.totalorder %v330, 2
        %vm471 = vmand %vm470, %vm457
        %v472 = vsel %vm471, %v469, 0.0
        %v473 = vadd.f32 %v460, %v472
        %475 = vrot.lane.b32.xlu0 %v436, 115
        %v476 = vpop.permute.xlu0 %475
        %478 = vrot.lane.b32.xlu0 %v436, 3
        %v479 = vpop.permute.xlu0 %478
        %vm481 = vcmask 23552
        %v482 = vsel %vm481, %v476, %v479
        %vm483 = vcmp.ge.s32.totalorder %v330, 3
        %vm484 = vmand %vm483, %vm457
        %v485 = vsel %vm484, %v482, 0.0
        %v486 = vadd.f32 %v473, %v485
        %488 = vrot.lane.b32.xlu0 %v439, 116
        %v489 = vpop.permute.xlu0 %488
        %491 = vrot.lane.b32.xlu0 %v439, 4
        %v492 = vpop.permute.xlu0 %491
        %v494 = vsel %vm402, %v489, %v492
        %vm495 = vcmp.ge.s32.totalorder %v330, 4
        %vm496 = vmand %vm495, %vm457
        %v497 = vsel %vm496, %v494, 0.0
        %v498 = vadd.f32 %v486, %v497
        %500 = vrot.lane.b32.xlu0 %v441, 118
        %v501 = vpop.permute.xlu0 %500
        %503 = vrot.lane.b32.xlu0 %v441, 6
        %v504 = vpop.permute.xlu0 %503
        %vm506 = vcmask 48128
        %v507 = vsel %vm506, %v501, %v504
        %vm508 = vcmp.ge.s32.totalorder %v330, 6
        %vm509 = vmand %vm508, %vm457
        %v510 = vsel %vm509, %v507, 0.0
        %v511 = vadd.f32 %v498, %v510
        %513 = vrot.lane.b32.xlu0 %v444, 120
        %v514 = vpop.permute.xlu0 %513
        %516 = vrot.lane.b32.xlu0 %v444, 8
        %v517 = vpop.permute.xlu0 %516
        %vm519 = vcmask 64512
        %v520 = vsel %vm519, %v514, %v517
        %vm521 = vcmp.ge.s32.totalorder %v330, 8
        %vm522 = vmand %vm521, %vm457
        %v523 = vsel %vm522, %v520, 0.0
        %v524 = vadd.f32 %v511, %v523
        %vm525 = vcmp.gt.f32.partialorder %v524, 0.0
        %v526 = vmin.f32 %v524, 0.0
        %v527 = vmul.f32 %v526, 1.442695
        %v528 = vpow.pop %v527
        %v529 = vsub.f32 %v528, 1.0
        %v530 = vsel %vm525, %v524, %v529
        %v531 = vpack.c.bf16 %v331, %v530
        %533 = vset.pattern.permute.xlu0 0
        %534 = vperm.xlu0 %533, %v347
        %v535 = vpop.permute.xlu0 %534
        %vm537 = vcmask 97280
        %v539 = vsel %vm537, %v346, 0
        %vm541 = vcmask 1045504
        %v543 = vsel %vm541, %v531, 0
        %545 = vmatpush.bf16.msra.mxu0 0
        %546 = vmatpush.bf16.msra.mxu0 0
        %547 = vmatpush.bf16.msra.mxu0 0
        %548 = vmatpush.bf16.msra.mxu0 0
        %549 = vmatpush.bf16.msra.mxu0 0
        %550 = vmatpush.bf16.msra.mxu0 0
        %551 = vmatpush.bf16.msra.mxu0 0
        %552 = vmatpush.bf16.msra.mxu0 %v543
        %553 = vmatmul.bf16.gmra.mxu0 %v539
        %v554 = vpop.f32.mrf.mxu0
        %v555 = vadd.f32 %v535, %v554
        %v556 = vpop.f32.mrf.mxu0
        %557 = vdwg.mxu0
        %v558 = vld [vmem:[%s5] sm:$0xf]
        %v559 = vld [vmem:[%s5 + $0x4] sm:$0xf]
        %v560 = vld [vmem:[%s5 + $0x8] sm:$0xf]
        %v561 = vld [vmem:[%s5 + $0xc] sm:$0xf]
        %v562 = vld [vmem:[%s5 + $0x10] sm:$0xf]
        %v563 = vld [vmem:[%s5 + $0x14] sm:$0xf]
        %v564 = vld [vmem:[%s6] sm:$0xff]
        %v565 = vld [vmem:[%s6 + $0x8] sm:$0xff]
        %v566 = vld [vmem:[%s6 + $0x10] sm:$0xff]
        %v567 = vld [vmem:[%s6 + $0x18] sm:$0xff]
        %v568 = vld [vmem:[%s6 + $0x20] sm:$0xff]
        %v569 = vld [vmem:[%s6 + $0x28] sm:$0xff]
        %v570 = vld [vmem:[%s7] sm:$0x3]
        %v571 = vld [vmem:[%s8] sm:$0xf]
        %v572 = vpack.c.bf16 %v555, %v555
        %574 = vset.pattern.permute.xlu0 0
        %575 = vperm.xlu0 %574, %v564
        %v576 = vpop.permute.xlu0 %575
        %579 = vset.pattern.permute.xlu0 0
        %580 = vperm.xlu0 %579, %v565
        %v581 = vpop.permute.xlu0 %580
        %584 = vset.pattern.permute.xlu0 0
        %585 = vperm.xlu0 %584, %v566
        %v586 = vpop.permute.xlu0 %585
        %589 = vset.pattern.permute.xlu0 0
        %590 = vperm.xlu0 %589, %v567
        %v591 = vpop.permute.xlu0 %590
        %594 = vset.pattern.permute.xlu0 0
        %595 = vperm.xlu0 %594, %v568
        %v596 = vpop.permute.xlu0 %595
        %599 = vset.pattern.permute.xlu0 0
        %600 = vperm.xlu0 %599, %v569
        %v601 = vpop.permute.xlu0 %600
        %v609 = vunpack.c.l.b16 %v558
        %v610 = vunpack.c.l.b16 %v559
        %v611 = vunpack.c.l.b16 %v560
        %v612 = vunpack.c.l.b16 %v561
        %v613 = vunpack.c.l.b16 %v562
        %v614 = vunpack.c.l.b16 %v563
        %v615 = vpack.c.b16 %v610, %v609
        %v616 = vpack.c.b16 %v612, %v611
        %v617 = vpack.c.b16 %v614, %v613
        %v619 = vsel %vm402, %v615, 0
        %v622 = vsel %vm402, %v616, 0
        %v625 = vsel %vm402, %v617, 0
        %v628 = vsel %vm415, %v572, 0
        %630 = vmatpush.bf16.msra.mxu0 0
        %631 = vmatpush.bf16.msra.mxu0 0
        %632 = vmatpush.bf16.msra.mxu0 0
        %633 = vmatpush.bf16.msra.mxu0 0
        %634 = vmatpush.bf16.msra.mxu0 0
        %635 = vmatpush.bf16.msra.mxu0 0
        %636 = vmatpush.bf16.msra.mxu0 0
        %637 = vmatpush.bf16.msra.mxu0 %v628
        %638 = vmatmul.bf16.gmra.mxu0 %v619
        %v639 = vpop.f32.mrf.mxu0
        %v640 = vadd.f32 %v576, %v639
        %v641 = vpop.f32.mrf.mxu0
        %v642 = vadd.f32 %v581, %v641
        %643 = vmatmul.bf16.gmra.mxu0 %v622
        %v644 = vpop.f32.mrf.mxu0
        %v645 = vadd.f32 %v586, %v644
        %v646 = vpop.f32.mrf.mxu0
        %v647 = vadd.f32 %v591, %v646
        %648 = vmatmul.bf16.gmra.mxu0 %v625
        %v649 = vpop.f32.mrf.mxu0
        %v650 = vadd.f32 %v596, %v649
        %v651 = vpop.f32.mrf.mxu0
        %v652 = vadd.f32 %v601, %v651
        %653 = vdwg.mxu0
        %655 = vrot.lane.b32.xlu0 %v642, 114
        %v656 = vpop.permute.xlu0 %655
        %658 = vrot.lane.b32.xlu0 %v642, 2
        %v659 = vpop.permute.xlu0 %658
        %v661 = vsel %vm468, %v656, %v659
        %v662 = vsel %vm471, %v661, 0.0
        %v663 = vadd.f32 %v640, %v662
        %665 = vrot.lane.b32.xlu0 %v645, 116
        %v666 = vpop.permute.xlu0 %665
        %668 = vrot.lane.b32.xlu0 %v645, 4
        %v669 = vpop.permute.xlu0 %668
        %v671 = vsel %vm402, %v666, %v669
        %v672 = vsel %vm496, %v671, 0.0
        %v673 = vadd.f32 %v663, %v672
        %675 = vrot.lane.b32.xlu0 %v647, 118
        %v676 = vpop.permute.xlu0 %675
        %678 = vrot.lane.b32.xlu0 %v647, 6
        %v679 = vpop.permute.xlu0 %678
        %v681 = vsel %vm506, %v676, %v679
        %v682 = vsel %vm509, %v681, 0.0
        %v683 = vadd.f32 %v673, %v682
        %685 = vrot.lane.b32.xlu0 %v650, 120
        %v686 = vpop.permute.xlu0 %685
        %688 = vrot.lane.b32.xlu0 %v650, 8
        %v689 = vpop.permute.xlu0 %688
        %v691 = vsel %vm519, %v686, %v689
        %v692 = vsel %vm522, %v691, 0.0
        %v693 = vadd.f32 %v683, %v692
        %695 = vrot.lane.b32.xlu0 %v652, 124
        %v696 = vpop.permute.xlu0 %695
        %698 = vrot.lane.b32.xlu0 %v652, 12
        %v699 = vpop.permute.xlu0 %698
        %v701 = vsel %vm537, %v696, %v699
        %vm702 = vcmp.ge.s32.totalorder %v330, 12
        %vm703 = vmand %vm702, %vm457
        %v704 = vsel %vm703, %v701, 0.0
        %v705 = vadd.f32 %v693, %v704
        %vm706 = vcmp.gt.f32.partialorder %v705, 0.0
        %v707 = vmin.f32 %v705, 0.0
        %v708 = vmul.f32 %v707, 1.442695
        %v709 = vpow.pop %v708
        %v710 = vsub.f32 %v709, 1.0
        %v711 = vsel %vm706, %v705, %v710
        %v712 = vpack.c.bf16 %v555, %v711
        %714 = vset.pattern.permute.xlu0 0
        %715 = vperm.xlu0 %714, %v571
        %v716 = vpop.permute.xlu0 %715
        %v719 = vsel %vm537, %v570, 0
        %v722 = vsel %vm541, %v712, 0
        %724 = vmatpush.bf16.msra.mxu0 0
        %725 = vmatpush.bf16.msra.mxu0 0
        %726 = vmatpush.bf16.msra.mxu0 0
        %727 = vmatpush.bf16.msra.mxu0 0
        %728 = vmatpush.bf16.msra.mxu0 0
        %729 = vmatpush.bf16.msra.mxu0 0
        %730 = vmatpush.bf16.msra.mxu0 0
        %731 = vmatpush.bf16.msra.mxu0 %v722
        %732 = vmatmul.bf16.gmra.mxu0 %v719
        %v733 = vpop.f32.mrf.mxu0
        %v734 = vadd.f32 %v716, %v733
        %v735 = vpop.f32.mrf.mxu0
        %736 = vdwg.mxu0
        %vm737 = vcmask 125952
        %738 = vst.msk [vmem:[%s323] sm:$0xf] %vm737, %v734
        %s739 = sand.u32 %s225, 1
        %s740 = scalar_lea.sflag [#allocation3], %s739
        %s741 = sand.u32 %s225, 1
        %s742 = smul.addr %s741, 4
        %s743 = scalar_lea.vmem [#allocation2], %s742
        // Predicated region
        $region57: #{tpu_custom_call.1} parent=55 // pred_check
          %p744 = pneg %p235
        $region58: #{tpu_custom_call.1} parent=55 // pred_check_branch
          %746 = sbr.rel (%p744) target = $region60
        $region59: #{tpu_custom_call.1} parent=55 // pred_region
          %748 = vsyncadd %s740, 0
          %s749 = smul.addr %s23, 4
          %s750 = scalar_lea.hbm %s9, %s749
          %s752 = sshll.u32 %s743, 4
          %s753 = int_to_ptr.vmem [resolvable:$true] %s752
          %s754 = sshll.u32 %s750, 4
          %s755 = int_to_ptr.hbm [resolvable:$true] %s754
          %757 = dma.vmem_to_hbm [thread:$0]  %s753, 64, %s755, %s740
        $region60: #{tpu_custom_call.1} parent=55 // pred_fallthru
          _
      $region56: #{tpu_custom_call.1} parent=5 // pred_fallthru
        _
      %p758 = scmp.le.s32.totalorder 2, %s18
      // Predicated region
      $region61: #{tpu_custom_call.1} parent=5 // pred_check
        %p759 = pneg %p758
      $region62: #{tpu_custom_call.1} parent=5 // pred_check_branch
        %761 = sbr.rel (%p759) target = $region64
      $region63: #{tpu_custom_call.1} parent=5 // pred_region
        %s762 = ssub.s32 %s18, 2
        // Predicated region
        $region65: #{tpu_custom_call.1} parent=63 // pred_check
          %p763 = pneg %p241
        $region66: #{tpu_custom_call.1} parent=63 // pred_check_branch
          %765 = sbr.rel (%p763) target = $region68
        $region67: #{tpu_custom_call.1} parent=63 // pred_region
          %s766 = sand.u32 %s226, 1
          %s767 = scalar_lea.sflag [#allocation3], %s766
          %s768 = sand.u32 %s226, 1
          %s769 = smul.addr %s768, 4
          %s770 = scalar_lea.vmem [#allocation2], %s769
          %772 = dma.done %s767, 64
        $region68: #{tpu_custom_call.1} parent=63 // pred_fallthru
          _
      $region64: #{tpu_custom_call.1} parent=5 // pred_fallthru
        _
    $region6: #{tpu_custom_call.1} parent=1 // loop_footer
      %s22 = sadd.s32 1, %s18
    $region7: #{tpu_custom_call.1} parent=1 // loop_footer_branch
      %17 = sbr.rel target = $region3
    $region8: #{tpu_custom_call.1} parent=1 // loop_exit
      _
    %773 = vsyncpa [#allocation3], 1
    %s774 = scalar_lea.sflag [#allocation3], 1
    %775 = vsyncpa %s774, 1

</llo_original>
